<compile_context>
chip_gen: v7x
topology: tpu7x:2x2x1
jax: 0.10.0
libtpu: 0.0.40
codegen_flags: <defaults>
</compile_context>

<pallas_src>
import numpy as np
import jax
import jax.numpy as jnp
from jax.experimental import pallas as pl
from jax.experimental.pallas import tpu as pltpu


# ----------------------------------------------------------------------------
# Per-generation knobs (v7x: 2 TCs, 64 MiB VMEM; v5e/v6e: 1 TC, 128 MiB VMEM)
# ----------------------------------------------------------------------------
def _device_kind():
    try:
        return jax.devices()[0].device_kind.lower()
    except Exception:
        return ""


_KIND = _device_kind()
if ("v7" in _KIND) or ("7x" in _KIND):
    VMEM_LIMIT_BYTES = 56 * 1024 * 1024
    DECODER_CORE_SPLIT = 2          # shard batch across the 2 TensorCores
elif ("v5" in _KIND) or ("v6" in _KIND):
    VMEM_LIMIT_BYTES = 100 * 1024 * 1024
    DECODER_CORE_SPLIT = 1          # single TC: shard axis is pure overhead
else:
    VMEM_LIMIT_BYTES = 48 * 1024 * 1024
    DECODER_CORE_SPLIT = 1


def _round_up(x, m):
    return ((x + m - 1) // m) * m


# ----------------------------------------------------------------------------
# Encoder kernel: 1x1-conv projection + hoisted W_a(a) attention projection
# ----------------------------------------------------------------------------
def _encoder_kernel(x_ref, wp_ref, bp_ref, wa_ref, a_ref, wa_out_ref):
    # x_ref: (TM, C) pooled feature rows (bf16); 1x1 conv == row matmul.
    a = (jnp.dot(x_ref[...], wp_ref[...], preferred_element_type=jnp.float32)
         + bp_ref[...])
    a_ref[...] = a
    # Hoisted, timestep-invariant attention projection W_a(a): computed once here
    # instead of T-1 times inside the serial decoder recurrence.  Stored bf16.
    wa_out_ref[...] = jnp.dot(a.astype(jnp.bfloat16), wa_ref[...],
                              preferred_element_type=jnp.float32
                              ).astype(jnp.bfloat16)


def encoder_forward(feats_nchw, proj_w_t, proj_b, wa_w, pool_hw, *, tm=512):
    B, C, H, W = feats_nchw.shape
    Hp, Wp = pool_hw
    kh, kw = H // Hp, W // Wp
    L = Hp * Wp
    A = wa_w.shape[1]
    # Adaptive avg-pool (evenly divisible case) as wrapper glue: memory-bound,
    # XLA handles it fine; keeps the kernel input a lane-dense (rows, C) slab.
    pooled = feats_nchw.reshape(B, C, Hp, kh, Wp, kw).mean(axis=(3, 5))   # (B,C,Hp,Wp)
    rows = jnp.transpose(pooled.reshape(B, C, L), (0, 2, 1)).reshape(B * L, C)

    M = B * L
    tm = min(tm, _round_up(M, 8))
    Mp = _round_up(M, tm)
    rows_p = jnp.pad(rows, ((0, Mp - M), (0, 0))) if Mp > M else rows
    rows_p = rows_p.astype(jnp.bfloat16)          # bf16 MXU operands, f32 acc
    wp_bf = proj_w_t.astype(jnp.bfloat16)
    wa_bf = wa_w.astype(jnp.bfloat16)

    a_rows, wa_rows = pl.pallas_call(
        _encoder_kernel,
        out_shape=(jax.ShapeDtypeStruct((Mp, C), jnp.float32),
                   jax.ShapeDtypeStruct((Mp, A), jnp.bfloat16)),
        grid=(Mp // tm,),
        in_specs=[
            pl.BlockSpec((tm, C), lambda i: (i, 0)),
            pl.BlockSpec((C, C), lambda i: (0, 0), pipeline_mode=pl.Buffered(1)),
            pl.BlockSpec((1, C), lambda i: (0, 0), pipeline_mode=pl.Buffered(1)),
            pl.BlockSpec((C, A), lambda i: (0, 0), pipeline_mode=pl.Buffered(1)),
        ],
        out_specs=(pl.BlockSpec((tm, C), lambda i: (i, 0)),
                   pl.BlockSpec((tm, A), lambda i: (i, 0))),
        compiler_params=pltpu.CompilerParams(
            dimension_semantics=("parallel",),
            vmem_limit_bytes=VMEM_LIMIT_BYTES),
    )(rows_p, wp_bf, proj_b, wa_bf)
    return a_rows[:M].reshape(B, L, C), wa_rows[:M].reshape(B, L, A)


# ----------------------------------------------------------------------------
# Tiled parallel linear kernel (fc vocab projection, hoisted emb-gate & init matmuls)
# ----------------------------------------------------------------------------
def _linear_kernel(x_ref, w_ref, b_ref, o_ref):
    o_ref[...] = (jnp.dot(x_ref[...], w_ref[...],
                          preferred_element_type=jnp.float32)
                  + b_ref[...])


def linear_forward(x, w, b, *, tm=512, tn=1024):
    M, K = x.shape
    _, N = w.shape
    tm = min(tm, _round_up(M, 8))
    Mp = _round_up(M, tm)
    if N <= tn:
        tn, Np = N, N
    else:
        Np = _round_up(N, tn)
    xp = jnp.pad(x, ((0, Mp - M), (0, 0))) if Mp > M else x
    wp = jnp.pad(w, ((0, 0), (0, Np - N))) if Np > N else w
    bp = jnp.pad(b, ((0, 0), (0, Np - N))) if Np > N else b
    xp = xp.astype(jnp.bfloat16)                  # bf16 MXU operands, f32 acc
    wp = wp.astype(jnp.bfloat16)
    out = pl.pallas_call(
        _linear_kernel,
        out_shape=jax.ShapeDtypeStruct((Mp, Np), jnp.float32),
        grid=(Mp // tm, Np // tn),
        in_specs=[pl.BlockSpec((tm, K), lambda i, j: (i, 0)),
                  pl.BlockSpec((K, tn), lambda i, j: (0, j)),
                  pl.BlockSpec((1, tn), lambda i, j: (0, j))],
        out_specs=pl.BlockSpec((tm, tn), lambda i, j: (i, j)),
        compiler_params=pltpu.CompilerParams(
            dimension_semantics=("parallel", "parallel"),
            vmem_limit_bytes=VMEM_LIMIT_BYTES),
    )(xp, wp, bp)
    return out[:M, :N]


# ----------------------------------------------------------------------------
# Decoder step kernel: DualAdditiveAttention + LSTMCell
#   (emb@W_ih_e, W_a(a), init-state and the fc projection are all hoisted out)
# ----------------------------------------------------------------------------
def _decoder_step_kernel(a_ref, wa_ref, gpre_ref, h0_ref, c0_ref,
                         whall_ref, v_ref, betaw_ref, betab_ref, wihd_ref,
                         h_out_ref, alphas_ref,
                         h_ref, c_ref):
    t = pl.program_id(1)
    a = a_ref[...]                       # (Bs, L, D) annotation vectors (bf16)
    wa = wa_ref[...]                     # (Bs, L, A) hoisted W_a(a)      (bf16)
    Bs, L, _ = a.shape
    A = wa.shape[-1]
    Lp = alphas_ref.shape[-1]

    # init_hidden_state was hoisted to the wrapper; just load it into the
    # core-private VMEM scratch once per batch shard.  The time axis is
    # "arbitrary", so h/c persist across t (required for the recurrence).
    @pl.when(t == 0)
    def _init():
        h_ref[...] = h0_ref[...]
        c_ref[...] = c0_ref[...]

    h = h_ref[...]                       # (Bs, H) f32
    c = c_ref[...]
    Hd = h.shape[-1]

    # --- Single fused h-matmul: [W_h + W_c | W_hh] -> (Bs, A + 4H).
    #     (context_input == prev_h == h under teacher forcing, so W_h(h)+W_c(h)
    #      folds into one column block; W_hh shares the same MXU push.)
    h_all = jnp.dot(h.astype(jnp.bfloat16), whall_ref[...],
                    preferred_element_type=jnp.float32)
    whc = h_all[:, :A]                   # attention part
    whh = h_all[:, A:]                   # LSTM-gate part

    # --- DualAdditiveAttention (f32 math; bf16 + f32 promotes to f32).
    score = jnp.tanh(wa + whc[:, None, :])                                # (Bs, L, A)
    e = jnp.sum(score * v_ref[...][None, :, :], axis=-1)                  # (Bs, L)
    e_max = jnp.max(e, axis=1, keepdims=True)
    p = jnp.exp(e - e_max)
    # NOTE: approx reciprocal (EUP) — tiny relative error vs strict f32 softmax.
    alpha = p * pl.reciprocal(jnp.sum(p, axis=1, keepdims=True), approx=True)
    beta = jax.nn.sigmoid(jnp.sum(h * betaw_ref[...], axis=-1, keepdims=True)
                          + betab_ref[...])                               # (Bs, 1)
    # bmm(alpha.unsqueeze(1), a) as a VPU broadcast-multiply + L reduce (the
    # batched MXU contraction is Bs independent M=1 pushes — worse at small Bs).
    context = jnp.sum(alpha[:, :, None] * a, axis=1)                      # (Bs, D)
    gated = beta * context

    # --- LSTMCell.  gpre already contains emb @ W_ih_e + b_ih + b_hh (hoisted).
    gates = (gpre_ref[...] + whh
             + jnp.dot(gated.astype(jnp.bfloat16), wihd_ref[...],
                       preferred_element_type=jnp.float32))
    i_g = jax.nn.sigmoid(gates[:, 0 * Hd:1 * Hd])
    f_g = jax.nn.sigmoid(gates[:, 1 * Hd:2 * Hd])
    g_g = jnp.tanh(gates[:, 2 * Hd:3 * Hd])
    o_g = jax.nn.sigmoid(gates[:, 3 * Hd:4 * Hd])
    c_new = f_g * c + i_g * g_g
    h_new = o_g * jnp.tanh(c_new)

    h_out_ref[...] = h_new          # vocab projection happens in a separate kernel
    if Lp > L:                      # lane-dense alphas store (pad L up to mult of 128)
        alphas_ref[...] = jnp.concatenate(
            [alpha, jnp.zeros((Bs, Lp - L), jnp.float32)], axis=-1)
    else:
        alphas_ref[...] = alpha
    h_ref[...] = h_new
    c_ref[...] = c_new


_DEC_WEIGHTS = ['w_h_all', 'v', 'beta_w', 'beta_b', 'wih_d']


def decoder_forward(a, wa_pre, emb_seq, kp, *, core_split=DECODER_CORE_SPLIT):
    Tm1, B, E = emb_seq.shape
    _, L, D = a.shape
    A = wa_pre.shape[-1]
    H = kp['fc_w'].shape[0]
    V = kp['fc_w'].shape[1]
    G = kp['wih_d'].shape[1]                    # 4H

    # --- Hoisted timestep-invariant work (full-MXU-utilization matmuls) -----
    # emb @ W_ih_e + (b_ih + b_hh) for all timesteps at once.
    gates_pre = linear_forward(emb_seq.reshape(Tm1 * B, E),
                               kp['wih_e'], kp['b_lstm']).reshape(Tm1, B, G)
    # init_hidden_state: mean over L + one fused (B, D) @ (D, 2H) matmul + tanh.
    mean_a = a.mean(axis=1)                                                # (B, D)
    hc0 = jnp.tanh(linear_forward(mean_a, kp['init_whc'], kp['init_bhc']))  # (B, 2H)
    h0, c0 = hc0[:, :H], hc0[:, H:]

    Bp = _round_up(max(B, 1), 8 * core_split)   # sublane-pad batch; mult of 8 per core
    Bs = Bp // core_split
    Lp = _round_up(L, 128)                      # lane-dense alphas output

    def pad_batch(x, axis):
        if Bp == B:
            return x
        pad = [(0, 0)] * x.ndim
        pad[axis] = (0, Bp - B)
        return jnp.pad(x, pad)

    a_p = pad_batch(a, 0).astype(jnp.bfloat16).reshape(core_split, Bs, L, D)
    wa_p = pad_batch(wa_pre, 0).reshape(core_split, Bs, L, A)   # already bf16
    gpre_p = pad_batch(gates_pre, 1).reshape(Tm1, core_split, Bs, G)
    h0_p = pad_batch(h0, 0).reshape(core_split, Bs, H)
    c0_p = pad_batch(c0, 0).reshape(core_split, Bs, H)

    def const_spec(shape):              # constant block index -> single-buffer
        nd = len(shape)
        return pl.BlockSpec(shape, lambda p_, t_, _nd=nd: (0,) * _nd,
                            pipeline_mode=pl.Buffered(1))

    # TODO(synk): on v7x the leading "parallel" axis is intended to shard across
    # the 2 TensorCores; pltpu.CORE_PARALLEL / pl.core_map is the explicit form.
    h_seq, alphas = pl.pallas_call(
        _decoder_step_kernel,
        out_shape=(jax.ShapeDtypeStruct((Tm1, core_split, Bs, H), jnp.float32),
                   jax.ShapeDtypeStruct((Tm1, core_split, Bs, Lp), jnp.float32)),
        grid=(core_split, Tm1),
        in_specs=[pl.BlockSpec((None, Bs, L, D), lambda p_, t_: (p_, 0, 0, 0),
                               pipeline_mode=pl.Buffered(1)),
                  pl.BlockSpec((None, Bs, L, A), lambda p_, t_: (p_, 0, 0, 0),
                               pipeline_mode=pl.Buffered(1)),
                  pl.BlockSpec((None, None, Bs, G), lambda p_, t_: (t_, p_, 0, 0)),
                  pl.BlockSpec((None, Bs, H), lambda p_, t_: (p_, 0, 0),
                               pipeline_mode=pl.Buffered(1)),
                  pl.BlockSpec((None, Bs, H), lambda p_, t_: (p_, 0, 0),
                               pipeline_mode=pl.Buffered(1))]
                 + [const_spec(tuple(kp[k].shape)) for k in _DEC_WEIGHTS],
        out_specs=(pl.BlockSpec((None, None, Bs, H), lambda p_, t_: (t_, p_, 0, 0)),
                   pl.BlockSpec((None, None, Bs, Lp), lambda p_, t_: (t_, p_, 0, 0))),
        scratch_shapes=[pltpu.VMEM((Bs, H), jnp.float32),    # h state (core-private)
                        pltpu.VMEM((Bs, H), jnp.float32)],   # c state (core-private)
        compiler_params=pltpu.CompilerParams(
            dimension_semantics=("parallel", "arbitrary"),
            vmem_limit_bytes=VMEM_LIMIT_BYTES),
    )(a_p, wa_p, gpre_p, h0_p, c0_p, *[kp[k] for k in _DEC_WEIGHTS])

    # Vocabulary projection: one MXU-efficient parallel matmul over all timesteps
    # instead of T-1 tiny M=Bs matmuls inside the serial recurrence.
    h_flat = h_seq.reshape(Tm1 * Bp, H)
    logits_flat = linear_forward(h_flat, kp['fc_w'], kp['fc_b'])
    logits = jnp.transpose(logits_flat.reshape(Tm1, Bp, V)[:, :B], (1, 0, 2))
    alphas = jnp.transpose(alphas.reshape(Tm1, Bp, Lp)[:, :B, :L], (1, 0, 2))
    return logits, alphas                              # (B, T-1, V), (B, T-1, L)


# ----------------------------------------------------------------------------
# pack_padded_sequence(..., batch_first=True, enforce_sorted=False).data glue
# ----------------------------------------------------------------------------
def pack_padded(data, lengths):
    lengths = np.asarray(lengths)
    order = np.argsort(-lengths, kind='stable')
    rows = []
    for t in range(int(lengths.max())):
        for b in order:
            if lengths[b] > t:
                rows.append(data[b, t])
    return jnp.stack(rows, axis=0)


# ----------------------------------------------------------------------------
# Parameters (deterministic, synthetic)
# ----------------------------------------------------------------------------
def make_params(key, *, vocab, embed_dim, feat_dim, hidden_dim, attn_dim):
    ks = jax.random.split(key, 19)
    u = lambda k, shape, s=0.1: jax.random.uniform(k, shape, jnp.float32, -s, s)
    p = {}
    p['proj_w'] = u(ks[0], (feat_dim, feat_dim))          # 1x1 conv (Cin, Cout)
    p['proj_b'] = u(ks[1], (1, feat_dim))
    p['embed']  = u(ks[2], (vocab, embed_dim), 0.5)
    p['wa']     = u(ks[3], (feat_dim, attn_dim))          # W_a^T
    p['wh']     = u(ks[4], (hidden_dim, attn_dim))        # W_h^T
    p['wc']     = u(ks[5], (hidden_dim, attn_dim))        # W_c^T
    p['v']      = u(ks[6], (1, attn_dim))                 # v weight row
    p['beta_w'] = u(ks[7], (1, hidden_dim))
    p['beta_b'] = u(ks[8], (1, 1))
    p['init_wh'] = u(ks[9], (feat_dim, hidden_dim))
    p['init_bh'] = u(ks[10], (1, hidden_dim))
    p['init_wc'] = u(ks[11], (feat_dim, hidden_dim))
    p['init_bc'] = u(ks[12], (1, hidden_dim))
    p['w_ih']   = u(ks[13], (embed_dim + feat_dim, 4 * hidden_dim))
    p['b_ih']   = u(ks[14], (1, 4 * hidden_dim))
    p['w_hh']   = u(ks[15], (hidden_dim, 4 * hidden_dim))
    p['b_hh']   = u(ks[16], (1, 4 * hidden_dim))
    p['fc_w']   = u(ks[17], (hidden_dim, vocab))
    p['fc_b']   = u(ks[18], (1, vocab))
    return p


def kernel_params(p, embed_dim):
    E = embed_dim
    kp = dict(p)
    # W_h and W_c are both applied to h (prev_h == h under teacher forcing), and
    # W_hh shares the same operand h -> one fused (H, A + 4H) weight block.
    whc = p['wh'] + p['wc']
    kp['w_h_all'] = jnp.concatenate([whc, p['w_hh']], axis=1).astype(jnp.bfloat16)
    kp['wih_e']   = p['w_ih'][:E, :]                        # (E, 4H): hoisted matmul
    kp['wih_d']   = p['w_ih'][E:, :].astype(jnp.bfloat16)   # (D, 4H): context part
    kp['b_lstm']  = p['b_ih'] + p['b_hh']                   # fused LSTM bias (hoisted)
    # init_hidden_state weights fused for one hoisted (B, D) @ (D, 2H) matmul.
    kp['init_whc'] = jnp.concatenate([p['init_wh'], p['init_wc']], axis=1)
    kp['init_bhc'] = jnp.concatenate([p['init_bh'], p['init_bc']], axis=1)
    return kp


# ----------------------------------------------------------------------------
# Pure-JAX reference (mirrors the PyTorch forward, eval-mode dropout, tf=1.0)
# ----------------------------------------------------------------------------
def ref_encoder(feats_nchw, p, pool_hw):
    B, C, H, W = feats_nchw.shape
    Hp, Wp = pool_hw
    kh, kw = H // Hp, W // Wp
    pooled = feats_nchw.reshape(B, C, Hp, kh, Wp, kw).mean(axis=(3, 5))
    a = jnp.transpose(pooled.reshape(B, C, Hp * Wp), (0, 2, 1))
    return a @ p['proj_w'] + p['proj_b']


def ref_decoder(a, captions, p):
    B, L, D = a.shape
    T = captions.shape[1]
    Hd = p['wh'].shape[0]
    mean_a = a.mean(axis=1)
    h = jnp.tanh(mean_a @ p['init_wh'] + p['init_bh'])
    c = jnp.tanh(mean_a @ p['init_wc'] + p['init_bc'])
    logits_list, alpha_list = [], []
    for t in range(1, T):
        inp = captions[:, t - 1]
        wa = a @ p['wa']
        wh = h @ p['wh']
        wc = h @ p['wc']
        score = jnp.tanh(wa + wh[:, None, :] + wc[:, None, :])
        e = jnp.sum(score * p['v'][None, :, :], axis=-1)
        alpha = jax.nn.softmax(e, axis=1)
        beta = jax.nn.sigmoid(jnp.sum(h * p['beta_w'], axis=-1, keepdims=True)
                              + p['beta_b'])
        context = jnp.sum(alpha[:, :, None] * a, axis=1)
        gated = beta * context
        emb = p['embed'][inp]
        x = jnp.concatenate([emb, gated], axis=1)
        gates = x @ p['w_ih'] + p['b_ih'] + h @ p['w_hh'] + p['b_hh']
        i_g = jax.nn.sigmoid(gates[:, :Hd])
        f_g = jax.nn.sigmoid(gates[:, Hd:2 * Hd])
        g_g = jnp.tanh(gates[:, 2 * Hd:3 * Hd])
        o_g = jax.nn.sigmoid(gates[:, 3 * Hd:])
        c = f_g * c + i_g * g_g
        h = o_g * jnp.tanh(c)
        logits_list.append(h @ p['fc_w'] + p['fc_b'])
        alpha_list.append(alpha)
    return jnp.stack(logits_list, 1), jnp.stack(alpha_list, 1)


# ----------------------------------------------------------------------------
if __name__ == "__main__":
    key = jax.random.PRNGKey(0)
    B = 2
    FEAT_DIM = 32            # stands in for 512 (vgg19 feature_dim)
    HF = WF = 8              # backbone feature-map spatial dims
    POOL = (4, 4)            # stands in for AdaptiveAvgPool2d((14, 14))
    L = POOL[0] * POOL[1]
    EMBED, HIDDEN, ATTN, VOCAB = 16, 32, 32, 64
    T = 8
    lengths = [8, 6]

    k_feat, k_cap, k_par = jax.random.split(key, 3)
    feats = jax.random.normal(k_feat, (B, FEAT_DIM, HF, WF), jnp.float32)
    captions = jax.random.randint(k_cap, (B, T), 0, VOCAB, jnp.int32)

    p = make_params(k_par, vocab=VOCAB, embed_dim=EMBED, feat_dim=FEAT_DIM,
                    hidden_dim=HIDDEN, attn_dim=ATTN)
    kp = kernel_params(p, EMBED)

    # ---- Pallas forward ----
    a, wa_pre = encoder_forward(feats, p['proj_w'], p['proj_b'], p['wa'], POOL)
    emb_seq = jnp.transpose(p['embed'][captions[:, :T - 1]], (1, 0, 2))   # (T-1, B, E)
    logits, alphas = decoder_forward(a, wa_pre, emb_seq, kp)
    jax.block_until_ready((a, logits, alphas))
    packed_scores = pack_padded(np.asarray(jax.device_get(logits)),
                                [l - 1 for l in lengths])

    # ---- pure-JAX reference check (bf16 MXU operands -> slightly looser tol) ----
    a_ref = ref_encoder(feats, p, POOL)
    logits_ref, alphas_ref = ref_decoder(a_ref, captions, p)
    np.testing.assert_allclose(np.asarray(a), np.asarray(a_ref), rtol=3e-2, atol=3e-2)
    np.testing.assert_allclose(np.asarray(logits), np.asarray(logits_ref),
                               rtol=3e-2, atol=3e-2)
    np.testing.assert_allclose(np.asarray(alphas), np.asarray(alphas_ref),
                               rtol=3e-2, atol=3e-2)

    assert packed_scores.shape == (sum(l - 1 for l in lengths), VOCAB)
    assert alphas.shape == (B, T - 1, L)
    print("KERNEL_OK")
</pallas_src>

<mosaic_0001>
module attributes {stable_mosaic.version = 11 : i64} {
  func.func @_encoder_kernel(%arg0: i32, %arg1: memref<32x32xbf16, #tpu.memory_space<vmem>>, %arg2: memref<32x32xbf16, #tpu.memory_space<vmem>>, %arg3: memref<1x32xf32, #tpu.memory_space<vmem>>, %arg4: memref<32x32xbf16, #tpu.memory_space<vmem>>, %arg5: memref<32x32xf32, #tpu.memory_space<vmem>>, %arg6: memref<32x32xbf16, #tpu.memory_space<vmem>>) attributes {dimension_semantics = [#tpu.dimension_semantics<parallel>], iteration_bounds = array<i64: 1>, scalar_prefetch = 0 : i64, scratch_operands = 0 : i64, tpu.core_type = #tpu.core_type<tc>, window_params = [{transform_indices = @transform_0, window_bounds = array<i64: 32, 32>}, {pipeline_mode = #tpu.pipeline_mode<synchronous>, transform_indices = @transform_1, window_bounds = array<i64: 32, 32>}, {pipeline_mode = #tpu.pipeline_mode<synchronous>, transform_indices = @transform_2, window_bounds = array<i64: 1, 32>}, {pipeline_mode = #tpu.pipeline_mode<synchronous>, transform_indices = @transform_3, window_bounds = array<i64: 32, 32>}, {transform_indices = @transform_4, window_bounds = array<i64: 32, 32>}, {transform_indices = @transform_5, window_bounds = array<i64: 32, 32>}]} {
    %c0 = arith.constant 0 : index
    %c0_0 = arith.constant 0 : index
    %0 = vector.load %arg1[%c0, %c0_0] : memref<32x32xbf16, #tpu.memory_space<vmem>>, vector<32x32xbf16>
    %c0_1 = arith.constant 0 : index
    %c0_2 = arith.constant 0 : index
    %1 = vector.load %arg2[%c0_1, %c0_2] : memref<32x32xbf16, #tpu.memory_space<vmem>>, vector<32x32xbf16>
    %cst = arith.constant dense<0.000000e+00> : vector<32x32xf32>
    %2 = tpu.matmul %0, %1, %cst {dimension_numbers = #tpu.dot_dimension_numbers<[1], [0], [0], [1], [0, 0, 1, 1], [], []>} : vector<32x32xbf16>, vector<32x32xbf16>, vector<32x32xf32> -> vector<32x32xf32>
    %c0_3 = arith.constant 0 : index
    %c0_4 = arith.constant 0 : index
    %3 = vector.load %arg3[%c0_3, %c0_4] : memref<1x32xf32, #tpu.memory_space<vmem>>, vector<1x32xf32>
    %4 = vector.broadcast %3 : vector<1x32xf32> to vector<32x32xf32>
    %5 = arith.addf %2, %4 : vector<32x32xf32>
    %c0_5 = arith.constant 0 : index
    %c0_6 = arith.constant 0 : index
    %6 = vector.load %arg5[%c0_5, %c0_6] : memref<32x32xf32, #tpu.memory_space<vmem>>, vector<32x32xf32>
    tpu.vector_store %arg5[%c0_5, %c0_6], %5 {strides = array<i32>} : memref<32x32xf32, #tpu.memory_space<vmem>>, vector<32x32xf32>,
    %7 = arith.truncf %5 : vector<32x32xf32> to vector<32x32xbf16>
    %c0_7 = arith.constant 0 : index
    %c0_8 = arith.constant 0 : index
    %8 = vector.load %arg4[%c0_7, %c0_8] : memref<32x32xbf16, #tpu.memory_space<vmem>>, vector<32x32xbf16>
    %cst_9 = arith.constant dense<0.000000e+00> : vector<32x32xf32>
    %9 = tpu.matmul %7, %8, %cst_9 {dimension_numbers = #tpu.dot_dimension_numbers<[1], [0], [0], [1], [0, 0, 1, 1], [], []>} : vector<32x32xbf16>, vector<32x32xbf16>, vector<32x32xf32> -> vector<32x32xf32>
    %10 = arith.truncf %9 : vector<32x32xf32> to vector<32x32xbf16>
    %c0_10 = arith.constant 0 : index
    %c0_11 = arith.constant 0 : index
    %11 = vector.load %arg6[%c0_10, %c0_11] : memref<32x32xbf16, #tpu.memory_space<vmem>>, vector<32x32xbf16>
    tpu.vector_store %arg6[%c0_10, %c0_11], %10 {strides = array<i32>} : memref<32x32xbf16, #tpu.memory_space<vmem>>, vector<32x32xbf16>,
    return
  }
  func.func @transform_0(%arg0: i32) -> (i32, i32) {
    %c0_i32 = arith.constant 0 : i32
    %c0_i32_0 = arith.constant 0 : i32
    return %arg0, %c0_i32 : i32, i32
  }
  func.func @transform_1(%arg0: i32) -> (i32, i32) {
    %c0_i32 = arith.constant 0 : i32
    %c0_i32_0 = arith.constant 0 : i32
    %c0_i32_1 = arith.constant 0 : i32
    return %c0_i32, %c0_i32_0 : i32, i32
  }
  func.func @transform_2(%arg0: i32) -> (i32, i32) {
    %c0_i32 = arith.constant 0 : i32
    %c0_i32_0 = arith.constant 0 : i32
    %c0_i32_1 = arith.constant 0 : i32
    return %c0_i32, %c0_i32_0 : i32, i32
  }
  func.func @transform_3(%arg0: i32) -> (i32, i32) {
    %c0_i32 = arith.constant 0 : i32
    %c0_i32_0 = arith.constant 0 : i32
    %c0_i32_1 = arith.constant 0 : i32
    return %c0_i32, %c0_i32_0 : i32, i32
  }
  func.func @transform_4(%arg0: i32) -> (i32, i32) {
    %c0_i32 = arith.constant 0 : i32
    %c0_i32_0 = arith.constant 0 : i32
    return %arg0, %c0_i32 : i32, i32
  }
  func.func @transform_5(%arg0: i32) -> (i32, i32) {
    %c0_i32 = arith.constant 0 : i32
    %c0_i32_0 = arith.constant 0 : i32
    return %arg0, %c0_i32 : i32, i32
  }
}

</mosaic_0001>

<llo_original>
// kernel: tpu_custom_call.1
$region0: #{tpu_custom_call.1}
  #allocation0 [shape = 'u32[]', space=smem, size = 0x4, offset = 0x4, fixed_abs, tag = 'smem constant byte address 0x4 - core index']
  #allocation1 [shape = 'u32[144,128]{1,0:T(1,128)}', space=vmem, size = 0x12000, scoped, tag = 'internal scratch']
  %s0 = inlined_call_operand.hbm [shape: bf16[32,32], index: 0, kind: input, shape index: {}]
  %s1 = inlined_call_operand.hbm [shape: bf16[32,32], index: 1, kind: input, shape index: {}]
  %s2 = inlined_call_operand.vmem [shape: f32[1,32], index: 2, kind: input, shape index: {}]
  %s3 = inlined_call_operand.hbm [shape: bf16[32,32], index: 3, kind: input, shape index: {}]
  %s4 = inlined_call_operand.hbm [shape: f32[32,32], index: 4, kind: output, shape index: {0}]
  %s5 = inlined_call_operand.hbm [shape: bf16[32,32], index: 5, kind: output, shape index: {1}]
  %6 = xla_tuple %s4, %s5
  %s7 = sld [smem:[#allocation0]]
  $region46: #{tpu_custom_call.1} parent=0
    _
  %s9 = ssub.s32 1, %s7
  %s10 = scalar_select 0, %s9, %s7
  $region1: #{tpu_custom_call.1} parent=0
    #allocation2 [shape = 'u8[8192]{0}', space=vmem, size = 0x2000, scoped, tag = 'input window, operand 0, single buffered']
    #allocation3 [shape = 's32[1]{0}', space=sflag, size = 0x4, scoped, tag = 'scoped memory for tpu_custom_call.1']
    #allocation4 [shape = 's32[1]{0}', space=sflag, size = 0x4, scoped, tag = 'scoped memory for tpu_custom_call.1']
    #allocation5 [shape = 'u8[8192]{0}', space=vmem, size = 0x2000, scoped, tag = 'input window, operand 1, single buffered']
    #allocation6 [shape = 's32[1]{0}', space=sflag, size = 0x4, scoped, tag = 'scoped memory for tpu_custom_call.1']
    #allocation7 [shape = 'u8[8192]{0}', space=vmem, size = 0x2000, scoped, tag = 'input window, operand 3, single buffered']
    #allocation8 [shape = 'u8[16384]{0}', space=vmem, size = 0x4000, scoped, tag = 'output window, operand 0, single buffered']
    #allocation9 [shape = 'u8[8192]{0}', space=vmem, size = 0x2000, scoped, tag = 'output window, operand 1, single buffered']
    #allocation10 [shape = 's32[1]{0}', space=sflag, size = 0x4, scoped, tag = 'scoped memory for tpu_custom_call.1']
    %11 = vsyncpa [#allocation3], 0
    %12 = vsyncpa [#allocation6], 0
    %13 = vsyncpa [#allocation4], 0
    %14 = vsyncpa [#allocation10], 0
    // Predicated region
    $region2: #{tpu_custom_call.1} parent=1 // pred_check
      _
    $region3: #{tpu_custom_call.1} parent=1 // pred_check_branch
      %16 = sbr.rel (0) target = $region5
    $region4: #{tpu_custom_call.1} parent=1 // pred_region
      %s18 = ssub.s32 256, 256
      %19 = vsyncadd [#allocation3], %s18
      %s20 = sshll.u32 [#allocation2], 4
      %s21 = int_to_ptr.vmem [resolvable:$true] %s20
      %26 = dma.hbm_to_vmem [thread:$0]  %s0, 256, %s21, [#allocation3], 64, 64, 4
    $region5: #{tpu_custom_call.1} parent=1 // pred_fallthru
      _
    // Predicated region
    $region6: #{tpu_custom_call.1} parent=1 // pred_check
      _
    $region7: #{tpu_custom_call.1} parent=1 // pred_check_branch
      %28 = sbr.rel (0) target = $region9
    $region8: #{tpu_custom_call.1} parent=1 // pred_region
      %s30 = ssub.s32 256, 256
      %31 = vsyncadd [#allocation6], %s30
      %s32 = sshll.u32 [#allocation5], 4
      %s33 = int_to_ptr.vmem [resolvable:$true] %s32
      %38 = dma.hbm_to_vmem [thread:$0]  %s1, 256, %s33, [#allocation6], 64, 64, 4
    $region9: #{tpu_custom_call.1} parent=1 // pred_fallthru
      _
    // Predicated region
    $region10: #{tpu_custom_call.1} parent=1 // pred_check
      _
    $region11: #{tpu_custom_call.1} parent=1 // pred_check_branch
      %40 = sbr.rel (0) target = $region13
    $region12: #{tpu_custom_call.1} parent=1 // pred_region
      _
    $region13: #{tpu_custom_call.1} parent=1 // pred_fallthru
      _
    // Predicated region
    $region14: #{tpu_custom_call.1} parent=1 // pred_check
      _
    $region15: #{tpu_custom_call.1} parent=1 // pred_check_branch
      %42 = sbr.rel (0) target = $region17
    $region16: #{tpu_custom_call.1} parent=1 // pred_region
      %s44 = ssub.s32 256, 256
      %45 = vsyncadd [#allocation6], %s44
      %s46 = sshll.u32 [#allocation7], 4
      %s47 = int_to_ptr.vmem [resolvable:$true] %s46
      %52 = dma.hbm_to_vmem [thread:$0]  %s3, 256, %s47, [#allocation6], 64, 64, 4
    $region17: #{tpu_custom_call.1} parent=1 // pred_fallthru
      _
    // Predicated region
    $region18: #{tpu_custom_call.1} parent=1 // pred_check
      _
    $region19: #{tpu_custom_call.1} parent=1 // pred_check_branch
      %54 = sbr.rel (0) target = $region21
    $region20: #{tpu_custom_call.1} parent=1 // pred_region
      %55 = dma.done [#allocation3], 256
    $region21: #{tpu_custom_call.1} parent=1 // pred_fallthru
      _
    // Predicated region
    $region22: #{tpu_custom_call.1} parent=1 // pred_check
      _
    $region23: #{tpu_custom_call.1} parent=1 // pred_check_branch
      %57 = sbr.rel (0) target = $region25
    $region24: #{tpu_custom_call.1} parent=1 // pred_region
      %58 = dma.done [#allocation6], 256
    $region25: #{tpu_custom_call.1} parent=1 // pred_fallthru
      _
    // Predicated region
    $region26: #{tpu_custom_call.1} parent=1 // pred_check
      _
    $region27: #{tpu_custom_call.1} parent=1 // pred_check_branch
      %60 = sbr.rel (0) target = $region29
    $region28: #{tpu_custom_call.1} parent=1 // pred_region
      %61 = dma.done [#allocation6], 256
    $region29: #{tpu_custom_call.1} parent=1 // pred_fallthru
      _
    %v63 = vld [vmem:[#allocation2] sm:$0xf]
    %v64 = vld [vmem:[#allocation2 + $0x4] sm:$0xf]
    %v65 = vld [vmem:[#allocation2 + $0x8] sm:$0xf]
    %v66 = vld [vmem:[#allocation2 + $0xc] sm:$0xf]
    %v67 = vld [vmem:[#allocation5] sm:$0xf]
    %v68 = vld [vmem:[#allocation5 + $0x4] sm:$0xf]
    %v69 = vld [vmem:[#allocation5 + $0x8] sm:$0xf]
    %v70 = vld [vmem:[#allocation5 + $0xc] sm:$0xf]
    %v71 = vld [vmem:[%s2] sm:$0x1]
    %v73 = vlaneseq
    %v74 = vshrl.u32 %v73, 7
    %v75 = vsub.s32 0, %v74
    %v76 = vrot.slane %v71, %v75
    %v82 = vunpack.c.l.b16 %v63
    %v83 = vunpack.c.l.b16 %v64
    %v84 = vunpack.c.l.b16 %v65
    %v85 = vunpack.c.l.b16 %v66
    %v86 = vpack.c.b16 %v83, %v82
    %v87 = vpack.c.b16 %v85, %v84
    %v92 = vunpack.c.l.b16 %v67
    %v93 = vunpack.c.l.b16 %v68
    %v94 = vunpack.c.l.b16 %v69
    %v95 = vunpack.c.l.b16 %v70
    %v96 = vpack.c.b16 %v93, %v92
    %v97 = vpack.c.b16 %v95, %v94
    %vm100 = vcmask 261120
    %v102 = vsel %vm100, %v86, 0
    %v105 = vsel %vm100, %v87, 0
    %107 = vmatprep.subr.bf16.mxu0 0
    %108 = vmatpush1.bf16.msra.mxu0 %v96
    %109 = vmatprep.subr.bf16.mxu0 0
    %110 = vmatpush1.bf16.msra.mxu0 %v97
    %111 = vmatprep.subr.bf16.mxu0 0
    %112 = vmatpush1.bf16.msra.mxu0 0
    %113 = vmatprep.subr.bf16.mxu0 0
    %114 = vmatpush1.bf16.msra.mxu0 0
    %115 = vmatprep.subr.bf16.mxu0 0
    %116 = vmatpush1.bf16.msra.mxu0 0
    %117 = vmatprep.subr.bf16.mxu0 0
    %118 = vmatpush1.bf16.msra.mxu0 0
    %119 = vmatprep.subr.bf16.mxu0 0
    %120 = vmatpush1.bf16.msra.mxu0 0
    %121 = vmatprep.subr.bf16.mxu0 0
    %122 = vmatpush1.bf16.msra.mxu0 0
    %123 = vmatprep.subr.bf16.mxu0 0
    %124 = vmatpush1.bf16.msra.mxu0 0
    %125 = vmatprep.subr.bf16.mxu0 0
    %126 = vmatpush1.bf16.msra.mxu0 0
    %127 = vmatprep.subr.bf16.mxu0 0
    %128 = vmatpush1.bf16.msra.mxu0 0
    %129 = vmatprep.subr.bf16.mxu0 0
    %130 = vmatpush1.bf16.msra.mxu0 0
    %131 = vmatprep.subr.bf16.mxu0 0
    %132 = vmatpush1.bf16.msra.mxu0 0
    %133 = vmatprep.subr.bf16.mxu0 0
    %134 = vmatpush1.bf16.msra.mxu0 0
    %135 = vmatprep.subr.bf16.mxu0 0
    %136 = vmatpush1.bf16.msra.mxu0 0
    %137 = vmatprep.subr.bf16.mxu0 0
    %138 = vmatpush1.bf16.msra.mxu0 0
    %139 = vmatprep.mubr.bf16.mxu0 0
    %140 = vmatmul.mubr.bf16.gmra.mrb[0].mxu0 %v102
    %v141 = vpop.f32.mrb[0].mxu0
    %v142 = vadd.f32 %v76, %v141
    %v143 = vpop.f32.mrb[0].mxu0
    %v144 = vpop.f32.mrb[0].mxu0
    %v145 = vadd.f32 %v76, %v144
    %v146 = vpop.f32.mrb[0].mxu0
    %147 = vmatprep.mubr.bf16.mxu0 0
    %148 = vmatmul.mubr.bf16.gmra.mrb[0].mxu0 %v105
    %v149 = vpop.f32.mrb[0].mxu0
    %v150 = vadd.f32 %v76, %v149
    %v151 = vpop.f32.mrb[0].mxu0
    %v152 = vpop.f32.mrb[0].mxu0
    %v153 = vadd.f32 %v76, %v152
    %v154 = vpop.f32.mrb[0].mxu0
    %155 = vdwg.mxu0
    %156 = vst.msk [vmem:[#allocation8] sm:$0xff] %vm100, %v142
    %157 = vst.msk [vmem:[#allocation8 + $0x8] sm:$0xff] %vm100, %v145
    %158 = vst.msk [vmem:[#allocation8 + $0x10] sm:$0xff] %vm100, %v150
    %159 = vst.msk [vmem:[#allocation8 + $0x18] sm:$0xff] %vm100, %v153
    %v160 = vpack.c.bf16 %v145, %v142
    %v161 = vpack.c.bf16 %v153, %v150
    %v162 = vld [vmem:[#allocation7] sm:$0xf]
    %v163 = vld [vmem:[#allocation7 + $0x4] sm:$0xf]
    %v164 = vld [vmem:[#allocation7 + $0x8] sm:$0xf]
    %v165 = vld [vmem:[#allocation7 + $0xc] sm:$0xf]
    %v170 = vunpack.c.l.b16 %v162
    %v171 = vunpack.c.l.b16 %v163
    %v172 = vunpack.c.l.b16 %v164
    %v173 = vunpack.c.l.b16 %v165
    %v174 = vpack.c.b16 %v171, %v170
    %v175 = vpack.c.b16 %v173, %v172
    %v179 = vsel %vm100, %v160, 0
    %v182 = vsel %vm100, %v161, 0
    %184 = vmatprep.subr.bf16.mxu0 0
    %185 = vmatpush1.bf16.msra.mxu0 %v174
    %186 = vmatprep.subr.bf16.mxu0 0
    %187 = vmatpush1.bf16.msra.mxu0 %v175
    %188 = vmatprep.subr.bf16.mxu0 0
    %189 = vmatpush1.bf16.msra.mxu0 0
    %190 = vmatprep.subr.bf16.mxu0 0
    %191 = vmatpush1.bf16.msra.mxu0 0
    %192 = vmatprep.subr.bf16.mxu0 0
    %193 = vmatpush1.bf16.msra.mxu0 0
    %194 = vmatprep.subr.bf16.mxu0 0
    %195 = vmatpush1.bf16.msra.mxu0 0
    %196 = vmatprep.subr.bf16.mxu0 0
    %197 = vmatpush1.bf16.msra.mxu0 0
    %198 = vmatprep.subr.bf16.mxu0 0
    %199 = vmatpush1.bf16.msra.mxu0 0
    %200 = vmatprep.subr.bf16.mxu0 0
    %201 = vmatpush1.bf16.msra.mxu0 0
    %202 = vmatprep.subr.bf16.mxu0 0
    %203 = vmatpush1.bf16.msra.mxu0 0
    %204 = vmatprep.subr.bf16.mxu0 0
    %205 = vmatpush1.bf16.msra.mxu0 0
    %206 = vmatprep.subr.bf16.mxu0 0
    %207 = vmatpush1.bf16.msra.mxu0 0
    %208 = vmatprep.subr.bf16.mxu0 0
    %209 = vmatpush1.bf16.msra.mxu0 0
    %210 = vmatprep.subr.bf16.mxu0 0
    %211 = vmatpush1.bf16.msra.mxu0 0
    %212 = vmatprep.subr.bf16.mxu0 0
    %213 = vmatpush1.bf16.msra.mxu0 0
    %214 = vmatprep.subr.bf16.mxu0 0
    %215 = vmatpush1.bf16.msra.mxu0 0
    %216 = vmatprep.mubr.bf16.mxu0 0
    %217 = vmatmul.mubr.bf16.gmra.mrb[0].mxu0 %v179
    %v218 = vpop.f32.mrb[0].mxu0
    %v219 = vadd.f32 0.0, %v218
    %v220 = vpop.f32.mrb[0].mxu0
    %v221 = vpop.f32.mrb[0].mxu0
    %v222 = vadd.f32 0.0, %v221
    %v223 = vpop.f32.mrb[0].mxu0
    %224 = vmatprep.mubr.bf16.mxu0 0
    %225 = vmatmul.mubr.bf16.gmra.mrb[0].mxu0 %v182
    %v226 = vpop.f32.mrb[0].mxu0
    %v227 = vadd.f32 0.0, %v226
    %v228 = vpop.f32.mrb[0].mxu0
    %v229 = vpop.f32.mrb[0].mxu0
    %v230 = vadd.f32 0.0, %v229
    %v231 = vpop.f32.mrb[0].mxu0
    %232 = vdwg.mxu0
    %v233 = vpack.c.bf16 %v222, %v219
    %v234 = vpack.c.bf16 %v230, %v227
    %v237 = vunpack.c.l.b16 %v233
    %v238 = vunpack.c.h.b16 %v233
    %v239 = vunpack.c.l.b16 %v234
    %v240 = vunpack.c.h.b16 %v234
    %v241 = vpack.c.b16 %v237, %v237
    %v242 = vpack.c.b16 %v238, %v238
    %v243 = vpack.c.b16 %v239, %v239
    %v244 = vpack.c.b16 %v240, %v240
    %vm249 = vcmask 257024
    %250 = vst.msk [vmem:[#allocation9] sm:$0xf] %vm249, %v241
    %251 = vst.msk [vmem:[#allocation9 + $0x4] sm:$0xf] %vm249, %v242
    %252 = vst.msk [vmem:[#allocation9 + $0x8] sm:$0xf] %vm249, %v243
    %253 = vst.msk [vmem:[#allocation9 + $0xc] sm:$0xf] %vm249, %v244
    // Predicated region
    $region30: #{tpu_custom_call.1} parent=1 // pred_check
      _
    $region31: #{tpu_custom_call.1} parent=1 // pred_check_branch
      %255 = sbr.rel (0) target = $region33
    $region32: #{tpu_custom_call.1} parent=1 // pred_region
      %s257 = ssub.s32 512, 512
      %258 = vsyncadd [#allocation4], %s257
      %s259 = sshll.u32 [#allocation8], 4
      %s260 = int_to_ptr.vmem [resolvable:$true] %s259
      %265 = dma.vmem_to_hbm [thread:$0]  %s260, 512, %s4, [#allocation4], 128, 128, 8
    $region33: #{tpu_custom_call.1} parent=1 // pred_fallthru
      _
    // Predicated region
    $region34: #{tpu_custom_call.1} parent=1 // pred_check
      _
    $region35: #{tpu_custom_call.1} parent=1 // pred_check_branch
      %267 = sbr.rel (0) target = $region37
    $region36: #{tpu_custom_call.1} parent=1 // pred_region
      %s269 = ssub.s32 256, 256
      %270 = vsyncadd [#allocation10], %s269
      %s271 = sshll.u32 [#allocation9], 4
      %s272 = int_to_ptr.vmem [resolvable:$true] %s271
      %277 = dma.vmem_to_hbm [thread:$0]  %s272, 256, %s5, [#allocation10], 64, 64, 4
    $region37: #{tpu_custom_call.1} parent=1 // pred_fallthru
      _
    // Predicated region
    $region38: #{tpu_custom_call.1} parent=1 // pred_check
      _
    $region39: #{tpu_custom_call.1} parent=1 // pred_check_branch
      %279 = sbr.rel (0) target = $region41
    $region40: #{tpu_custom_call.1} parent=1 // pred_region
      %280 = dma.done [#allocation4], 512
    $region41: #{tpu_custom_call.1} parent=1 // pred_fallthru
      _
    // Predicated region
    $region42: #{tpu_custom_call.1} parent=1 // pred_check
      _
    $region43: #{tpu_custom_call.1} parent=1 // pred_check_branch
      %282 = sbr.rel (0) target = $region45
    $region44: #{tpu_custom_call.1} parent=1 // pred_region
      %283 = dma.done [#allocation10], 256
    $region45: #{tpu_custom_call.1} parent=1 // pred_fallthru
      _
    %284 = vsyncpa [#allocation3], 1
    %285 = vsyncpa [#allocation6], 1
    %286 = vsyncpa [#allocation4], 1
    %287 = vsyncpa [#allocation10], 1

</llo_original>
